<compile_context>
chip_gen: v7x
topology: tpu7x:2x2x1
jax: 0.10.0
libtpu: 0.0.40
codegen_flags: <defaults>
</compile_context>

<pallas_src>
import functools

import jax
import jax.numpy as jnp
from jax import lax
from jax.experimental import pallas as pl
from jax.experimental.pallas import tpu as pltpu

# Bytes of live f32 temporaries (x, z, e) per logical element inside the kernel.
_F32_TEMP_BYTES = 12


def _round_up(v, m):
    return ((v + m - 1) // m) * m


# ---------------------------------------------------------------------------
# Path A: 2-D logits [R, C] — class axis on lanes, row sums on the MXU.
# ---------------------------------------------------------------------------
def _hloss_rows_kernel(x_ref, o_ref, *, total_rows, tb):
    i = pl.program_id(0)

    x = x_ref[...].astype(jnp.float32)                       # [tb, C]
    row_ids = i * tb + lax.broadcasted_iota(jnp.int32, (tb, 1), 0)
    valid = row_ids < total_rows                              # [tb, 1]

    m = jnp.max(x, axis=-1, keepdims=True)                    # [tb, 1] (XLU)
    # Mask ragged rows to a benign value BEFORE exp so padded garbage (NaN/Inf)
    # never reaches exp/log/div.
    z = jnp.where(valid, x - m, 0.0)                          # [tb, C]
    e = jnp.exp(z)                                            # EUP, only full-tile transcendental

    # Lane-axis sums on the idle MXU (dot with a ones matrix); all 128 output
    # lanes hold the same sum, keep lane 0.  f32/HIGHEST keeps full precision.
    ones = jnp.ones((e.shape[-1], 128), jnp.float32)
    s = jnp.dot(e, ones, preferred_element_type=jnp.float32,
                precision=jax.lax.Precision.HIGHEST)[:, :1]   # [tb, 1]
    ez = jnp.dot(e * z, ones, preferred_element_type=jnp.float32,
                 precision=jax.lax.Precision.HIGHEST)[:, :1]  # [tb, 1]

    # Per-row sum_c p*log(p) = sum(e*z)/s - log(s);  s >= 1 so this is safe.
    row = ez / s - jnp.log(s)                                 # [tb, 1]
    row = jnp.where(valid, row, 0.0)

    partial = jnp.sum(row)                                    # tiny sublane reduce
    o_ref[...] = jnp.broadcast_to(partial, o_ref.shape).astype(jnp.float32)


def _hloss_2d(x2d, budget_bytes, vmem_limit_bytes):
    R, C = x2d.shape
    itemsize = jnp.dtype(x2d.dtype).itemsize
    lane_c = _round_up(C, 128)
    # Per-row VMEM cost: double-buffered input block + live f32 temps.
    bytes_per_row = lane_c * (2 * itemsize + _F32_TEMP_BYTES)
    tb = max(8, (budget_bytes // bytes_per_row) // 8 * 8)
    if tb >= R:
        tb = R
    num_tiles = pl.cdiv(R, tb)
    # v7x megacore: ensure >= 2 parallel grid steps whenever the rows split.
    if num_tiles == 1 and R > 8:
        tb = _round_up(pl.cdiv(R, 2), 8)
        num_tiles = pl.cdiv(R, tb)

    kernel = functools.partial(_hloss_rows_kernel, total_rows=R, tb=tb)
    partials = pl.pallas_call(
        kernel,
        out_shape=jax.ShapeDtypeStruct((num_tiles, 1, 128), jnp.float32),
        grid_spec=pltpu.PrefetchScalarGridSpec(
            num_scalar_prefetch=0,
            grid=(num_tiles,),
            in_specs=[pl.BlockSpec((tb, C), lambda i: (i, 0))],
            out_specs=pl.BlockSpec((1, 1, 128), lambda i: (i, 0, 0)),
        ),
        compiler_params=pltpu.CompilerParams(
            dimension_semantics=("parallel",),
            vmem_limit_bytes=vmem_limit_bytes,
        ),
    )(x2d)
    return partials[:, 0, 0]


# ---------------------------------------------------------------------------
# Path B: ndim > 2 inputs viewed as [N, C, W] — class axis on sublanes,
# spatial axis on lanes.  No HBM transpose, no 128-lane padding of C.
# ---------------------------------------------------------------------------
def _hloss_chan_kernel(x_ref, o_ref, *, total_w, tw):
    wj = pl.program_id(1)

    x = x_ref[...].astype(jnp.float32)                        # [C, tw]
    lane_ids = wj * tw + lax.broadcasted_iota(jnp.int32, (1, tw), 1)
    valid = lane_ids < total_w                                # [1, tw]

    m = jnp.max(x, axis=0, keepdims=True)                     # [1, tw] sublane reduce
    z = jnp.where(valid, x - m, 0.0)                          # mask ragged lanes pre-exp
    e = jnp.exp(z)
    s = jnp.sum(e, axis=0, keepdims=True)                     # [1, tw] sublane reduce
    ez = jnp.sum(e * z, axis=0, keepdims=True)                # [1, tw] sublane reduce

    col = ez / s - jnp.log(s)                                 # per spatial position
    col = jnp.where(valid, col, 0.0)

    partial = jnp.sum(col)                                    # one lane reduce per tile
    o_ref[...] = jnp.broadcast_to(partial, o_ref.shape).astype(jnp.float32)


def _hloss_nchw(x3, budget_bytes, vmem_limit_bytes):
    N, C, W = x3.shape
    itemsize = jnp.dtype(x3.dtype).itemsize
    sub_c = _round_up(C, 8)
    # Per-lane-column VMEM cost: double-buffered input + live f32 temps.
    bytes_per_col = sub_c * (2 * itemsize + _F32_TEMP_BYTES)
    tw = max(128, (budget_bytes // bytes_per_col) // 128 * 128)
    if tw >= W:
        tw = W
    num_w = pl.cdiv(W, tw)
    # v7x megacore: ensure >= 2 parallel grid steps whenever possible.
    if N * num_w == 1 and W > 128:
        tw = _round_up(pl.cdiv(W, 2), 128)
        num_w = pl.cdiv(W, tw)

    kernel = functools.partial(_hloss_chan_kernel, total_w=W, tw=tw)
    partials = pl.pallas_call(
        kernel,
        out_shape=jax.ShapeDtypeStruct((N, num_w, 1, 128), jnp.float32),
        grid_spec=pltpu.PrefetchScalarGridSpec(
            num_scalar_prefetch=0,
            grid=(N, num_w),
            in_specs=[pl.BlockSpec((None, C, tw), lambda n, wj: (n, 0, wj))],
            out_specs=pl.BlockSpec((1, 1, 1, 128), lambda n, wj: (n, wj, 0, 0)),
        ),
        compiler_params=pltpu.CompilerParams(
            dimension_semantics=("parallel", "parallel"),
            vmem_limit_bytes=vmem_limit_bytes,
        ),
    )(x3)
    return partials[:, :, 0, 0].reshape(-1)


# ---------------------------------------------------------------------------
# Public wrapper
# ---------------------------------------------------------------------------
def hloss(x, *, working_set_budget_bytes=12 << 20, vmem_limit_bytes=32 << 20):
    """Entropy loss: -mean(softmax(x, dim=1) * log_softmax(x, dim=1)).

    2-D inputs [N, C] use the lane-class path; >2-D inputs keep their native
    NC* layout (class axis = dim 1 on sublanes, spatial collapsed onto lanes).
    Returns a float32 scalar.
    """
    if x.ndim < 2:
        raise ValueError("HLoss expects an input with ndim >= 2 (softmax dim=1).")

    numel = x.size
    if x.ndim == 2:
        partials = _hloss_2d(x, working_set_budget_bytes, vmem_limit_bytes)
    else:
        N, C = x.shape[0], x.shape[1]
        W = 1
        for d in x.shape[2:]:
            W *= d
        x3 = x.reshape(N, C, W)  # free view: collapses contiguous trailing dims
        partials = _hloss_nchw(x3, working_set_budget_bytes, vmem_limit_bytes)

    # Tiny host-side reduction of per-tile f32 partials, exact denominator.
    # (Plain f32 sum; fine for these sizes — see correctness notes.)
    total = jnp.sum(partials, dtype=jnp.float32)
    return (-total / jnp.float32(numel)).astype(jnp.float32)


if __name__ == "__main__":
    key = jax.random.PRNGKey(0)
    k1, k2, k3, k4 = jax.random.split(key, 4)

    def ref_hloss(x):
        xf = x.astype(jnp.float32)
        p = jax.nn.softmax(xf, axis=1)
        logp = jax.nn.log_softmax(xf, axis=1)
        return -1.0 * jnp.mean(p * logp)

    # 1) 4-D NCHW input (batch=2, channels=4, 16x16): sublane-class path,
    #    no HBM transpose, grid (N=2, 1) -> both v7x TCs busy.
    x1 = jax.random.normal(k1, (2, 4, 16, 16), dtype=jnp.float32)
    r1 = hloss(x1)
    jax.block_until_ready(r1)
    assert jnp.allclose(r1, ref_hloss(x1), atol=1e-5, rtol=1e-4), (r1, ref_hloss(x1))

    # 2) 2-D logits, C > 128, small budget -> multi-tile ragged grid with
    #    row-masking and MXU dot-with-ones row sums.
    x2 = jax.random.normal(k2, (52, 160), dtype=jnp.float32) * 3.0
    r2 = hloss(x2, working_set_budget_bytes=128 * 1024)
    jax.block_until_ready(r2)
    assert jnp.allclose(r2, ref_hloss(x2), atol=2e-5, rtol=1e-4), (r2, ref_hloss(x2))

    # 3) bf16 2-D input accepted directly (cast to f32 happens in VMEM).
    x3 = jax.random.normal(k3, (16, 32), dtype=jnp.bfloat16)
    r3 = hloss(x3)
    jax.block_until_ready(r3)
    assert jnp.allclose(r3, ref_hloss(x3), atol=1e-4, rtol=1e-3), (r3, ref_hloss(x3))

    # 4) NCHW with non-aligned spatial size (W=150) and a small budget so the
    #    lane axis is tiled (tw=128) -> exercises the ragged-lane mask path.
    x4 = jax.random.normal(k4, (2, 6, 10, 15), dtype=jnp.float32)
    r4 = hloss(x4, working_set_budget_bytes=32 * 1024)
    jax.block_until_ready(r4)
    assert jnp.allclose(r4, ref_hloss(x4), atol=1e-5, rtol=1e-4), (r4, ref_hloss(x4))

    print("KERNEL_OK")
</pallas_src>

<mosaic_0001>
module attributes {stable_mosaic.version = 11 : i64} {
  func.func @_hloss_chan_kernel(%arg0: i32, %arg1: i32, %arg2: memref<1x4x256xf32, #tpu.memory_space<vmem>>, %arg3: memref<1x1x1x128xf32, #tpu.memory_space<vmem>>) attributes {dimension_semantics = [#tpu.dimension_semantics<parallel>, #tpu.dimension_semantics<parallel>], iteration_bounds = array<i64: 2, 1>, scalar_prefetch = 0 : i64, scratch_operands = 0 : i64, tpu.core_type = #tpu.core_type<tc>, window_params = [{transform_indices = @transform_0, window_bounds = array<i64: 1, 4, 256>}, {transform_indices = @transform_1, window_bounds = array<i64: 1, 1, 1, 128>}]} {
    %c0 = arith.constant 0 : index
    %c0_0 = arith.constant 0 : index
    %c0_1 = arith.constant 0 : index
    %0 = vector.load %arg2[%c0, %c0_0, %c0_1] : memref<1x4x256xf32, #tpu.memory_space<vmem>>, vector<1x4x256xf32>
    %1 = vector.shape_cast %0 : vector<1x4x256xf32> to vector<4x256xf32>
    %c256_i32 = arith.constant 256 : i32
    %2 = arith.muli %arg1, %c256_i32 : i32
    %3 = tpu.iota {dimensions = array<i32: 1>} : vector<1x256xi32>
    %4 = vector.broadcast %2 : i32 to vector<1x256xi32>
    %5 = arith.addi %4, %3 : vector<1x256xi32>
    %c256_i32_2 = arith.constant 256 : i32
    %6 = vector.broadcast %c256_i32_2 : i32 to vector<1x256xi32>
    %7 = arith.cmpi slt, %5, %6 : vector<1x256xi32>
    %cst = arith.constant dense<0xFF800000> : vector<256xf32>
    %8 = vector.multi_reduction <maximumf>, %1, %cst [0] : vector<4x256xf32> to vector<256xf32>
    %9 = vector.shape_cast %8 : vector<256xf32> to vector<1x256xf32>
    %10 = vector.broadcast %9 : vector<1x256xf32> to vector<4x256xf32>
    %11 = arith.subf %1, %10 : vector<4x256xf32>
    %cst_3 = arith.constant 0.000000e+00 : f32
    %12 = vector.shape_cast %7 : vector<1x256xi1> to vector<1x256xi1>
    %13 = vector.broadcast %12 : vector<1x256xi1> to vector<4x256xi1>
    %14 = vector.broadcast %cst_3 : f32 to vector<4x256xf32>
    %15 = arith.select %13, %11, %14 : vector<4x256xi1>, vector<4x256xf32>
    %16 = math.exp %15 : vector<4x256xf32>
    %cst_4 = arith.constant dense<0.000000e+00> : vector<256xf32>
    %17 = vector.multi_reduction <add>, %16, %cst_4 [0] : vector<4x256xf32> to vector<256xf32>
    %18 = vector.shape_cast %17 : vector<256xf32> to vector<1x256xf32>
    %19 = arith.mulf %16, %15 : vector<4x256xf32>
    %cst_5 = arith.constant dense<0.000000e+00> : vector<256xf32>
    %20 = vector.multi_reduction <add>, %19, %cst_5 [0] : vector<4x256xf32> to vector<256xf32>
    %21 = vector.shape_cast %20 : vector<256xf32> to vector<1x256xf32>
    %22 = arith.divf %21, %18 : vector<1x256xf32>
    %23 = math.log %18 : vector<1x256xf32>
    %24 = arith.subf %22, %23 : vector<1x256xf32>
    %cst_6 = arith.constant 0.000000e+00 : f32
    %25 = vector.broadcast %cst_6 : f32 to vector<1x256xf32>
    %26 = arith.select %7, %24, %25 : vector<1x256xi1>, vector<1x256xf32>
    %27 = vector.shape_cast %26 : vector<1x256xf32> to vector<1x1x256xf32>
    %cst_7 = arith.constant dense<0.000000e+00> : vector<1xf32>
    %28 = vector.multi_reduction <add>, %27, %cst_7 [1, 2] : vector<1x1x256xf32> to vector<1xf32>
    %29 = vector.shape_cast %28 : vector<1xf32> to vector<1x1x1xf32>
    %30 = vector.extract %29[0, 0, 0] : f32 from vector<1x1x1xf32>
    %31 = vector.broadcast %30 : f32 to vector<1x1x1x128xf32>
    %c0_8 = arith.constant 0 : index
    %c0_9 = arith.constant 0 : index
    %c0_10 = arith.constant 0 : index
    %c0_11 = arith.constant 0 : index
    %32 = vector.load %arg3[%c0_8, %c0_9, %c0_10, %c0_11] : memref<1x1x1x128xf32, #tpu.memory_space<vmem>>, vector<1x1x1x128xf32>
    tpu.vector_store %arg3[%c0_8, %c0_9, %c0_10, %c0_11], %31 {strides = array<i32>} : memref<1x1x1x128xf32, #tpu.memory_space<vmem>>, vector<1x1x1x128xf32>,
    return
  }
  func.func @transform_0(%arg0: i32, %arg1: i32) -> (i32, i32, i32) {
    %c0_i32 = arith.constant 0 : i32
    %c0_i32_0 = arith.constant 0 : i32
    return %arg0, %c0_i32, %arg1 : i32, i32, i32
  }
  func.func @transform_1(%arg0: i32, %arg1: i32) -> (i32, i32, i32, i32) {
    %c0_i32 = arith.constant 0 : i32
    %c0_i32_0 = arith.constant 0 : i32
    %c0_i32_1 = arith.constant 0 : i32
    return %arg0, %arg1, %c0_i32, %c0_i32_0 : i32, i32, i32, i32
  }
}

</mosaic_0001>

<llo_original>
// kernel: tpu_custom_call.1
$region0: #{tpu_custom_call.1}
  #allocation0 [shape = 'u32[]', space=smem, size = 0x4, offset = 0x4, fixed_abs, tag = 'smem constant byte address 0x4 - core index']
  #allocation1 [shape = 'u32[144,128]{1,0:T(1,128)}', space=vmem, size = 0x12000, scoped, tag = 'internal scratch']
  %s0 = inlined_call_operand.hbm [shape: f32[2,4,256], index: 0, kind: input, shape index: {}]
  %s1 = inlined_call_operand.hbm [shape: f32[2,1,1,128], index: 1, kind: output, shape index: {}]
  %s2 = sld [smem:[#allocation0]]
  $region41: #{tpu_custom_call.1} parent=0
    _
  %s4 = ssub.s32 1, %s2
  %s5 = scalar_select 0, %s4, %s2
  $region1: #{tpu_custom_call.1} parent=0
    #allocation2 [shape = 'u8[8192]{0}', space=vmem, size = 0x2000, scoped, tag = 'input window, operand 0']
    #allocation3 [shape = 's32[2]{0}', space=sflag, size = 0x8, scoped, tag = 'scoped memory for tpu_custom_call.1']
    #allocation4 [shape = 's32[2]{0}', space=sflag, size = 0x8, scoped, tag = 'scoped memory for tpu_custom_call.1']
    #allocation5 [shape = 'u8[1024]{0}', space=vmem, size = 0x400, scoped, tag = 'output window, operand 0']
    %6 = vsyncpa [#allocation3], 0
    %s7 = scalar_lea.sflag [#allocation3], 1
    %8 = vsyncpa %s7, 0
    %9 = vsyncpa [#allocation4], 0
    %s10 = scalar_lea.sflag [#allocation4], 1
    %11 = vsyncpa %s10, 0
    loop: start=0, step=1, limit=4
    $region2: #{tpu_custom_call.1} parent=1 // loop_pre_header
      _
    $region3: #{tpu_custom_call.1} parent=1 // loop_header
      %s13 = sphi 0, %s17
      %p14 = scmp.ge.s32.totalorder %s13, 4
      %s20 = sphi 0, %s32
      %s21 = sphi 0, %s28
      %s22 = sphi 0, %s20
      %s23 = sphi 0, %s21
      %s24 = sphi 0, %s22
      %s25 = sphi 0, %s23
      %s37 = sphi 0, %s39
      %s40 = sphi 0, %s37
      %s41 = sphi 0, %s40
      %s57 = sphi 0, %s41
      %s65 = sphi 0, %s67
      %s68 = sphi 0, %s65
      %s69 = sphi 0, %s68
      %s85 = sphi 0, %s69
    $region4: #{tpu_custom_call.1} parent=1 // loop_header_branch
      %16 = sbr.rel (%p14) target = $region8
    $region5: #{tpu_custom_call.1} parent=1 // loop_body
      %s18 = ssub.s32 %s13, 1
      %s19 = ssub.s32 %s13, 2
      %s26 = sadd.s32 1, %s21
      %p27 = scmp.ge.s32.totalorder %s26, 1
      %s28 = scalar_select %p27, 0, %s26
      %s29 = sadd.s32 1, %s20
      %s30 = scalar_select %p27, %s29, %s20
      %p31 = scmp.ge.s32.totalorder %s30, 2
      %s32 = scalar_select %p31, 0, %s30
      %s33 = ssub.s32 %s20, %s32
      %s34 = ssub.s32 %s21, %s28
      %s35 = sor.u32 %s33, %s34
      %p36 = scmp.eq.s32.totalorder %s35, 0
      %s38 = sadd.s32 %s37, 1
      %s39 = scalar_select %p36, %s37, %s38
      %p42 = pneg %p36
      %p43 = scmp.eq.s32.totalorder %s13, 1
      %p44 = por %p42, %p43
      %p45 = scmp.ne.s32.totalorder %s37, %s40
      %p46 = scmp.eq.s32.totalorder %s13, 0
      %p47 = por %p45, %p46
      %p48 = scmp.ne.s32.totalorder %s37, %s40
      %p49 = scmp.eq.s32.totalorder %s18, 1
      %p50 = por %p48, %p49
      %p51 = scmp.ne.s32.totalorder %s40, %s41
      %p52 = scmp.eq.s32.totalorder %s18, 0
      %p53 = por %p51, %p52
      %p54 = scmp.ne.s32.totalorder %s40, %s41
      %p55 = scmp.eq.s32.totalorder %s19, 1
      %p56 = por %p54, %p55
      %p58 = scmp.ne.s32.totalorder %s41, %s57
      %p59 = scmp.eq.s32.totalorder %s19, 0
      %p60 = por %p58, %p59
      %s61 = ssub.s32 %s20, %s32
      %s62 = ssub.s32 %s21, %s28
      %s63 = sor.u32 %s61, %s62
      %p64 = scmp.eq.s32.totalorder %s63, 0
      %s66 = sadd.s32 %s65, 1
      %s67 = scalar_select %p64, %s65, %s66
      %p70 = pneg %p64
      %p71 = scmp.eq.s32.totalorder %s13, 1
      %p72 = por %p70, %p71
      %p73 = scmp.ne.s32.totalorder %s65, %s68
      %p74 = scmp.eq.s32.totalorder %s13, 0
      %p75 = por %p73, %p74
      %p76 = scmp.ne.s32.totalorder %s65, %s68
      %p77 = scmp.eq.s32.totalorder %s18, 1
      %p78 = por %p76, %p77
      %p79 = scmp.ne.s32.totalorder %s68, %s69
      %p80 = scmp.eq.s32.totalorder %s18, 0
      %p81 = por %p79, %p80
      %p82 = scmp.ne.s32.totalorder %s68, %s69
      %p83 = scmp.eq.s32.totalorder %s19, 1
      %p84 = por %p82, %p83
      %p86 = scmp.ne.s32.totalorder %s69, %s85
      %p87 = scmp.eq.s32.totalorder %s19, 0
      %p88 = por %p86, %p87
      %p89 = scmp.le.s32.totalorder 1, %s13
      %p90 = scmp.lt.s32.totalorder %s13, 3
      %p91 = pnand %p89, %p90
      %p92 = pneg %p91
      // Predicated region
      $region9: #{tpu_custom_call.1} parent=5 // pred_check
        _
      $region10: #{tpu_custom_call.1} parent=5 // pred_check_branch
        %94 = sbr.rel (%p91) target = $region12
      $region11: #{tpu_custom_call.1} parent=5 // pred_region
        %s95 = ssub.s32 %s13, 1
      $region12: #{tpu_custom_call.1} parent=5 // pred_fallthru
        _
      %p96 = scmp.lt.s32.totalorder %s13, 2
      // Predicated region
      $region13: #{tpu_custom_call.1} parent=5 // pred_check
        %p97 = pneg %p96
      $region14: #{tpu_custom_call.1} parent=5 // pred_check_branch
        %99 = sbr.rel (%p97) target = $region16
      $region15: #{tpu_custom_call.1} parent=5 // pred_region
        // Predicated region
        $region17: #{tpu_custom_call.1} parent=15 // pred_check
          %p100 = pneg %p47
        $region18: #{tpu_custom_call.1} parent=15 // pred_check_branch
          %102 = sbr.rel (%p100) target = $region20
        $region19: #{tpu_custom_call.1} parent=15 // pred_region
          %s103 = sand.u32 %s37, 1
          %s104 = scalar_lea.sflag [#allocation3], %s103
          %s105 = sand.u32 %s37, 1
          %s106 = smul.addr %s105, 8
          %s107 = scalar_lea.vmem [#allocation2], %s106
          %s108 = smul.u32 2, %s21
          %s110 = ssub.s32 128, 128
          %111 = vsyncadd %s104, %s110
          %s112 = smul.addr %s20, 2
          %s113 = sadd.s32 %s108, %s112
          %s114 = smul.addr %s113, 64
          %s115 = scalar_lea.hbm %s0, %s114
          %s117 = sshll.u32 %s107, 4
          %s118 = int_to_ptr.vmem [resolvable:$true] %s117
          %120 = dma.hbm_to_vmem [thread:$0]  %s115, 128, %s118, %s104
        $region20: #{tpu_custom_call.1} parent=15 // pred_fallthru
          _
      $region16: #{tpu_custom_call.1} parent=5 // pred_fallthru
        _
      %p121 = scmp.le.s32.totalorder 1, %s13
      %p122 = scmp.lt.s32.totalorder %s13, 3
      %p123 = pnand %p121, %p122
      %p124 = pneg %p123
      // Predicated region
      $region21: #{tpu_custom_call.1} parent=5 // pred_check
        _
      $region22: #{tpu_custom_call.1} parent=5 // pred_check_branch
        %126 = sbr.rel (%p123) target = $region24
      $region23: #{tpu_custom_call.1} parent=5 // pred_region
        %s127 = ssub.s32 %s13, 1
        %s128 = sand.u32 %s40, 1
        %s129 = scalar_lea.sflag [#allocation3], %s128
        %s130 = sand.u32 %s40, 1
        %s131 = smul.addr %s130, 8
        %s132 = scalar_lea.vmem [#allocation2], %s131
        // Predicated region
        $region25: #{tpu_custom_call.1} parent=23 // pred_check
          %p133 = pneg %p53
        $region26: #{tpu_custom_call.1} parent=23 // pred_check_branch
          %135 = sbr.rel (%p133) target = $region28
        $region27: #{tpu_custom_call.1} parent=23 // pred_region
          %136 = dma.done %s129, 128
        $region28: #{tpu_custom_call.1} parent=23 // pred_fallthru
          _
        %s137 = sand.u32 %s40, 1
        %s138 = scalar_lea.sflag [#allocation3], %s137
        %s139 = sand.u32 %s40, 1
        %s140 = smul.addr %s139, 8
        %s141 = scalar_lea.vmem [#allocation2], %s140
        %p142 = pneg %p53
        %p143 = pneg %p50
        %p144 = pneg %p81
        %p145 = pneg %p78
        %s146 = sand.u32 %s68, 1
        %s147 = scalar_lea.sflag [#allocation4], %s146
        %s148 = sand.u32 %s68, 1
        %s149 = scalar_lea.vmem [#allocation5], %s148
        %s150 = smul.u32 2, %s23
        %v151 = vld [vmem:[%s132] sm:$0xff]
        %s152 = smul.u32 %s23, 256
        %v153 = vlaneseq
        %v154 = vand.u32 %v153, 127
        %v155 = vadd.s32 %v154, 128
        %v156 = vstv %s152
        %v157 = vadd.s32 %v156, %v154
        %v158 = vadd.s32 %v156, %v155
        %vm159 = vcmp.lt.s32.totalorder %v157, 256
        %vm160 = vcmp.lt.s32.totalorder %v158, 256
        %v162 = vcombine.high %v151, %v151
        %vm164 = vcmask 1043456
        %v165 = vsel %vm164, %v151, -inf
        %v166 = vrot.slane %v165, 4
        %v167 = vmax.f32 %v165, %v166
        %v168 = vrot.slane %v167, 2
        %v169 = vmax.f32 %v167, %v168
        %v170 = vrot.slane %v169, 1
        %v171 = vmax.f32 %v169, %v170
        %v172 = vsel %vm164, %v162, -inf
        %v173 = vrot.slane %v172, 4
        %v174 = vmax.f32 %v172, %v173
        %v175 = vrot.slane %v174, 2
        %v176 = vmax.f32 %v174, %v175
        %v177 = vrot.slane %v176, 1
        %v178 = vmax.f32 %v176, %v177
        %v181 = vcombine.low %v171, %v178
        %v183 = vsub.f32 %v151, %v181
        %v184 = vsel %vm159, 1, 0
        %v185 = vsel %vm160, 1, 0
        %vm186 = vcmp.eq.s32.totalorder %v184, 1
        %vm187 = vcmp.eq.s32.totalorder %v185, 1
        %v189 = vcombine.high %v183, %v183
        %v191 = vsel %vm186, %v183, 0.0
        %v192 = vsel %vm187, %v189, 0.0
        %v193 = vmul.f32 %v191, 1.442695
        %v194 = vpow.pop %v193
        %v195 = vmul.f32 %v192, 1.442695
        %v196 = vpow.pop %v195
        %v197 = vsel %vm164, %v194, 0.0
        %v198 = vrot.slane %v197, 4
        %v199 = vadd.f32 %v197, %v198
        %v200 = vrot.slane %v199, 2
        %v201 = vadd.f32 %v199, %v200
        %v202 = vrot.slane %v201, 1
        %v203 = vadd.f32 %v201, %v202
        %v204 = vsel %vm164, %v196, 0.0
        %v205 = vrot.slane %v204, 4
        %v206 = vadd.f32 %v204, %v205
        %v207 = vrot.slane %v206, 2
        %v208 = vadd.f32 %v206, %v207
        %v209 = vrot.slane %v208, 1
        %v210 = vadd.f32 %v208, %v209
        %v211 = vmul.f32 %v194, %v191
        %v212 = vmul.f32 %v196, %v192
        %v213 = vsel %vm164, %v211, 0.0
        %v214 = vrot.slane %v213, 4
        %v215 = vadd.f32 %v213, %v214
        %v216 = vrot.slane %v215, 2
        %v217 = vadd.f32 %v215, %v216
        %v218 = vrot.slane %v217, 1
        %v219 = vadd.f32 %v217, %v218
        %v220 = vsel %vm164, %v212, 0.0
        %v221 = vrot.slane %v220, 4
        %v222 = vadd.f32 %v220, %v221
        %v223 = vrot.slane %v222, 2
        %v224 = vadd.f32 %v222, %v223
        %v225 = vrot.slane %v224, 1
        %v226 = vadd.f32 %v224, %v225
        %v227 = vrcp.pop %v203
        %v228 = vmul.f32 %v219, %v227
        %v229 = vrcp.pop %v210
        %v230 = vmul.f32 %v226, %v229
        %v231 = vlog2.pop %v203
        %v232 = vmul.f32 %v231, 0.6931472
        %v233 = vlog2.pop %v210
        %v234 = vmul.f32 %v233, 0.6931472
        %v235 = vsub.f32 %v228, %v232
        %v236 = vsub.f32 %v230, %v234
        %v237 = vsel %vm159, %v235, 0.0
        %v238 = vsel %vm160, %v236, 0.0
        %vm239 = vcmask 1040384
        %v240 = vsel %vm239, %v237, 0.0
        %v241 = vsel %vm239, %v238, 0.0
        %v242 = vadd.f32 %v240, %v241
        %243 = vadd.xlane.f32.xlu0 %v242
        %v244 = vpop.xlane.xlu0 %243
        %v245 = vrot.slane %v244, 4
        %v246 = vadd.f32 %v244, %v245
        %v247 = vrot.slane %v246, 2
        %v248 = vadd.f32 %v246, %v247
        %v249 = vrot.slane %v248, 1
        %v250 = vadd.f32 %v248, %v249
        %s251 = vtos %v250
        %v252 = vstv %s251
        %253 = vst [vmem:[%s149] sm:$0x1] %v252
        %s254 = sand.u32 %s68, 1
        %s255 = scalar_lea.sflag [#allocation4], %s254
        %s256 = sand.u32 %s68, 1
        %s257 = scalar_lea.vmem [#allocation5], %s256
        // Predicated region
        $region29: #{tpu_custom_call.1} parent=23 // pred_check
          %p258 = pneg %p78
        $region30: #{tpu_custom_call.1} parent=23 // pred_check_branch
          %260 = sbr.rel (%p258) target = $region32
        $region31: #{tpu_custom_call.1} parent=23 // pred_region
          %s262 = ssub.s32 16, 16
          %263 = vsyncadd %s255, %s262
          %s264 = sadd.s32 %s23, %s22
          %s265 = smul.addr %s264, 16
          %s266 = scalar_lea.hbm %s1, %s265
          %s268 = sshll.u32 %s257, 4
          %s269 = int_to_ptr.vmem [resolvable:$true] %s268
          %271 = dma.vmem_to_hbm [thread:$0]  %s269, 16, %s266, %s255
        $region32: #{tpu_custom_call.1} parent=23 // pred_fallthru
          _
      $region24: #{tpu_custom_call.1} parent=5 // pred_fallthru
        _
      %p272 = scmp.le.s32.totalorder 2, %s13
      // Predicated region
      $region33: #{tpu_custom_call.1} parent=5 // pred_check
        %p273 = pneg %p272
      $region34: #{tpu_custom_call.1} parent=5 // pred_check_branch
        %275 = sbr.rel (%p273) target = $region36
      $region35: #{tpu_custom_call.1} parent=5 // pred_region
        %s276 = ssub.s32 %s13, 2
        // Predicated region
        $region37: #{tpu_custom_call.1} parent=35 // pred_check
          %p277 = pneg %p84
        $region38: #{tpu_custom_call.1} parent=35 // pred_check_branch
          %279 = sbr.rel (%p277) target = $region40
        $region39: #{tpu_custom_call.1} parent=35 // pred_region
          %s280 = sand.u32 %s69, 1
          %s281 = scalar_lea.sflag [#allocation4], %s280
          %s282 = sand.u32 %s69, 1
          %s283 = scalar_lea.vmem [#allocation5], %s282
          %284 = dma.done %s281, 16
        $region40: #{tpu_custom_call.1} parent=35 // pred_fallthru
          _
      $region36: #{tpu_custom_call.1} parent=5 // pred_fallthru
        _
    $region6: #{tpu_custom_call.1} parent=1 // loop_footer
      %s17 = sadd.s32 1, %s13
    $region7: #{tpu_custom_call.1} parent=1 // loop_footer_branch
      %12 = sbr.rel target = $region3
    $region8: #{tpu_custom_call.1} parent=1 // loop_exit
      _
    %285 = vsyncpa [#allocation3], 1
    %s286 = scalar_lea.sflag [#allocation3], 1
    %287 = vsyncpa %s286, 1
    %288 = vsyncpa [#allocation4], 1
    %s289 = scalar_lea.sflag [#allocation4], 1
    %290 = vsyncpa %s289, 1

</llo_original>
